<compile_context>
chip_gen: v7x
topology: tpu7x:2x2x1
jax: 0.10.0
libtpu: 0.0.40
codegen_flags: <defaults>
</compile_context>

<pallas_src>
import jax
import jax.numpy as jnp
from jax.experimental import pallas as pl
from jax.experimental.pallas import tpu as pltpu

# ---- problem sizes (small, consistent with the module) ----
B = 8          # batch_size  (== num_class, required by the module's Linears)
C = 8          # num_class
S = 8          # sequence length
H = 32         # hidden size of the synthetic backbone
VOCAB = 32     # synthetic vocabulary size (power of 2)
SV = S * VOCAB # 256 — lane-dense contraction length


def relation_matcher_kernel(ids_ref, w_ref, out_ref):
    """Fused embed-gather + masked mean-pool + (classifier∘lin1∘dropout∘lin2).

    ids_ref : [B, SV]       int32, ids[b, s] repeated VOCAB times along lanes,
                            padded positions pre-set to sentinel -1.
    w_ref   : [SV + 1, C+1] float32 augmented fused weight:
                rows 0..SV-1, cols 0..C-1 : E_fused tiled S times
                rows 0..SV-1, col  C      : 1.0  (ones column -> denom)
                row  SV,      cols 0..C-1 : fused bias
    out_ref : [B, C]
    """
    ids = ids_ref[...]                                            # [B, SV] i32

    # Lane-dense one-hot: column k = s*VOCAB + v is 1 iff ids[b, s] == v.
    lane = jax.lax.broadcasted_iota(jnp.int32, (B, SV), 1)        # [B, SV]
    v_idx = jnp.bitwise_and(lane, VOCAB - 1)                      # k % VOCAB
    onehot = jnp.where(ids == v_idx,
                       jnp.float32(1.0), jnp.float32(0.0))        # [B, SV] f32

    # Single MXU matmul: columns 0..C-1 -> masked token-sum of fused logits,
    # column C -> per-row count of valid tokens (denominator).
    full = jnp.dot(onehot, w_ref[:SV, :],
                   preferred_element_type=jnp.float32)            # [B, C+1]
    logits = full[:, :C]                                          # [B, C]
    denom = jnp.maximum(full[:, C:], jnp.float32(1.0))            # [B, 1]

    bias = w_ref[SV:, :C]                                         # [1, C]
    out_ref[...] = logits / denom + bias


def fuse_params(params):
    """Eval-mode algebraic fusion of backbone head + lin1 + lin2 into ONE
    augmented weight buffer (done once, outside the kernel)."""
    emb_table, wc, bc, w1, b1, w2, b2 = params
    w_chain = wc @ w1 @ w2                                   # [H, C]
    e_fused = emb_table @ w_chain                            # [VOCAB, C]
    b_fused = bc @ w1 @ w2 + b1 @ w2 + b2                    # [C]

    e_tiled = jnp.tile(e_fused, (S, 1))                      # [SV, C]
    ones_col = jnp.ones((SV, 1), jnp.float32)                # denom column
    top = jnp.concatenate([e_tiled, ones_col], axis=1)       # [SV, C+1]
    bottom = jnp.concatenate(
        [b_fused.reshape(1, C), jnp.zeros((1, 1), jnp.float32)], axis=1)
    w_aug = jnp.concatenate([top, bottom], axis=0)           # [SV+1, C+1]
    return w_aug.astype(jnp.float32)


def relation_matcher_forward(input_ids, attention_mask, w_aug):
    ids = input_ids.astype(jnp.int32)
    mask = attention_mask.astype(jnp.int32)
    # Fold the mask into ids: padded positions -> sentinel -1 (matches no
    # vocab index), then repeat each id VOCAB times along the lane axis so
    # the kernel's contraction is lane-dense (K = S*VOCAB = 256).
    ids_masked = jnp.where(mask > 0, ids, jnp.int32(-1))          # [B, S]
    ids_rep = jnp.repeat(ids_masked, VOCAB, axis=1)               # [B, SV]

    vmem_spec = pl.BlockSpec(memory_space=pltpu.MemorySpace.VMEM)
    return pl.pallas_call(
        relation_matcher_kernel,
        out_shape=jax.ShapeDtypeStruct((B, C), jnp.float32),
        in_specs=[vmem_spec, vmem_spec],
        out_specs=vmem_spec,
    )(ids_rep, w_aug)


def reference_forward(input_ids, attention_mask, params):
    """Pure-JAX reference of the UNFUSED forward (eval-mode dropout)."""
    emb_table, wc, bc, w1, b1, w2, b2 = params
    x = jnp.take(emb_table, input_ids, axis=0)                  # [B, S, H]
    m = attention_mask.astype(jnp.float32)                      # [B, S]
    denom = jnp.maximum(jnp.sum(m, axis=1, keepdims=True), 1.0)
    pooled = jnp.sum(x * m[:, :, None], axis=1) / denom         # [B, H]
    logits = pooled @ wc + bc                                   # backbone head
    h = logits @ w1 + b1                                        # lin1
    # dropout(0.2): identity in eval mode
    return h @ w2 + b2                                          # lin2


def init_params(key):
    ks = jax.random.split(key, 7)
    scale = 0.1
    emb_table = jax.random.normal(ks[0], (VOCAB, H), jnp.float32) * scale
    wc = jax.random.normal(ks[1], (H, C), jnp.float32) * scale
    bc = jax.random.normal(ks[2], (C,), jnp.float32) * scale
    # lin1 / lin2: nn.Linear(batch_size, num_class) stored transposed [in, out].
    w1 = jax.random.normal(ks[3], (B, C), jnp.float32) * scale
    b1 = jax.random.normal(ks[4], (C,), jnp.float32) * scale
    w2 = jax.random.normal(ks[5], (B, C), jnp.float32) * scale   # B == C
    b2 = jax.random.normal(ks[6], (C,), jnp.float32) * scale
    return (emb_table, wc, bc, w1, b1, w2, b2)


if __name__ == "__main__":
    key = jax.random.PRNGKey(0)
    k_param, k_ids = jax.random.split(key)

    params = init_params(k_param)
    w_aug = fuse_params(params)

    input_ids = jax.random.randint(k_ids, (B, S), 0, VOCAB, dtype=jnp.int32)
    # valid prefix lengths 5..8 -> mask has some zeros, like real padding
    lengths = (jnp.arange(B) % 4) + 5
    attention_mask = (jnp.arange(S)[None, :] < lengths[:, None]).astype(jnp.int32)

    out = relation_matcher_forward(input_ids, attention_mask, w_aug)
    out = jax.block_until_ready(out)

    assert out.shape == (B, C) and out.dtype == jnp.float32
    assert bool(jnp.all(jnp.isfinite(out)))

    ref = reference_forward(input_ids, attention_mask, params)
    max_err = float(jnp.max(jnp.abs(out - ref)))
    assert max_err < 1e-3, f"kernel/reference mismatch: max abs err {max_err}"

    print("KERNEL_OK")
</pallas_src>

<mosaic_0001>
module attributes {stable_mosaic.version = 11 : i64} {
  func.func @relation_matcher_kernel(%arg0: memref<8x256xi32, #tpu.memory_space<vmem>>, %arg1: memref<257x9xf32, #tpu.memory_space<vmem>>, %arg2: memref<8x8xf32, #tpu.memory_space<vmem>>) attributes {dimension_semantics = [], scalar_prefetch = 0 : i64, scratch_operands = 0 : i64, tpu.core_type = #tpu.core_type<tc>} {
    %c0 = arith.constant 0 : index
    %c0_0 = arith.constant 0 : index
    %0 = vector.load %arg0[%c0, %c0_0] : memref<8x256xi32, #tpu.memory_space<vmem>>, vector<8x256xi32>
    %1 = tpu.iota {dimensions = array<i32: 1>} : vector<8x256xi32>
    %c31_i32 = arith.constant 31 : i32
    %2 = vector.broadcast %c31_i32 : i32 to vector<8x256xi32>
    %3 = arith.andi %1, %2 : vector<8x256xi32>
    %4 = arith.cmpi eq, %0, %3 : vector<8x256xi32>
    %cst = arith.constant 1.000000e+00 : f32
    %cst_1 = arith.constant 0.000000e+00 : f32
    %5 = vector.broadcast %cst : f32 to vector<8x256xf32>
    %6 = vector.broadcast %cst_1 : f32 to vector<8x256xf32>
    %7 = arith.select %4, %5, %6 : vector<8x256xi1>, vector<8x256xf32>
    %c0_2 = arith.constant 0 : index
    %c0_3 = arith.constant 0 : index
    %8 = vector.load %arg1[%c0_2, %c0_3] : memref<257x9xf32, #tpu.memory_space<vmem>>, vector<256x9xf32>
    %cst_4 = arith.constant dense<0.000000e+00> : vector<8x9xf32>
    %9 = tpu.matmul %7, %8, %cst_4 {dimension_numbers = #tpu.dot_dimension_numbers<[1], [0], [0], [1], [0, 0, 1, 1], [], []>} : vector<8x256xf32>, vector<256x9xf32>, vector<8x9xf32> -> vector<8x9xf32>
    %10 = vector.extract_strided_slice %9 {offsets = [0, 0], sizes = [8, 8], strides = [1, 1]} : vector<8x9xf32> to vector<8x8xf32>
    %11 = vector.extract_strided_slice %9 {offsets = [0, 8], sizes = [8, 1], strides = [1, 1]} : vector<8x9xf32> to vector<8x1xf32>
    %cst_5 = arith.constant 1.000000e+00 : f32
    %12 = vector.broadcast %cst_5 : f32 to vector<8x1xf32>
    %13 = arith.maximumf %11, %12 : vector<8x1xf32>
    %c256 = arith.constant 256 : index
    %c0_6 = arith.constant 0 : index
    %14 = vector.load %arg1[%c256, %c0_6] : memref<257x9xf32, #tpu.memory_space<vmem>>, vector<1x8xf32>
    %15 = vector.broadcast %13 : vector<8x1xf32> to vector<8x8xf32>
    %16 = arith.divf %10, %15 : vector<8x8xf32>
    %17 = vector.broadcast %14 : vector<1x8xf32> to vector<8x8xf32>
    %18 = arith.addf %16, %17 : vector<8x8xf32>
    %c0_7 = arith.constant 0 : index
    %c0_8 = arith.constant 0 : index
    %19 = vector.load %arg2[%c0_7, %c0_8] : memref<8x8xf32, #tpu.memory_space<vmem>>, vector<8x8xf32>
    tpu.vector_store %arg2[%c0_7, %c0_8], %18 {strides = array<i32>} : memref<8x8xf32, #tpu.memory_space<vmem>>, vector<8x8xf32>,
    return
  }
}

</mosaic_0001>

<llo_original>
// kernel: tpu_custom_call.1
$region0: #{tpu_custom_call.1}
  #allocation0 [shape = 'u32[]', space=smem, size = 0x4, offset = 0x4, fixed_abs, tag = 'smem constant byte address 0x4 - core index']
  #allocation1 [shape = 'u32[144,128]{1,0:T(1,128)}', space=vmem, size = 0x12000, scoped, tag = 'internal scratch']
  %s0 = inlined_call_operand.vmem [shape: s32[8,256], index: 0, kind: input, shape index: {}]
  %s1 = inlined_call_operand.vmem [shape: f32[257,9], index: 1, kind: input, shape index: {}]
  %s2 = inlined_call_operand.hbm [shape: f32[8,8], index: 2, kind: output, shape index: {}]
  %s3 = sld [smem:[#allocation0]]
  $region18: #{tpu_custom_call.1} parent=0
    _
  %s5 = ssub.s32 1, %s3
  %s6 = scalar_select 0, %s5, %s3
  $region1: #{tpu_custom_call.1} parent=0
    #allocation2 [shape = 'u8[4096]{0}', space=vmem, size = 0x1000, scoped, tag = 'output window, operand 0, single buffered']
    #allocation3 [shape = 's32[1]{0}', space=sflag, size = 0x4, scoped, tag = 'scoped memory for tpu_custom_call.1']
    %7 = vsyncpa [#allocation3], 0
    // Predicated region
    $region2: #{tpu_custom_call.1} parent=1 // pred_check
      _
    $region3: #{tpu_custom_call.1} parent=1 // pred_check_branch
      %9 = sbr.rel (0) target = $region5
    $region4: #{tpu_custom_call.1} parent=1 // pred_region
      _
    $region5: #{tpu_custom_call.1} parent=1 // pred_fallthru
      _
    // Predicated region
    $region6: #{tpu_custom_call.1} parent=1 // pred_check
      _
    $region7: #{tpu_custom_call.1} parent=1 // pred_check_branch
      %11 = sbr.rel (0) target = $region9
    $region8: #{tpu_custom_call.1} parent=1 // pred_region
      _
    $region9: #{tpu_custom_call.1} parent=1 // pred_fallthru
      _
    %v12 = vld [vmem:[%s0] sm:$0xff]
    %v13 = vld [vmem:[%s0 + $0x8] sm:$0xff]
    %v14 = vlaneseq
    %v15 = vand.u32 %v14, 127
    %v16 = vadd.s32 %v15, 128
    %v17 = vand.u32 %v15, 31
    %v18 = vand.u32 %v16, 31
    %vm19 = vcmp.eq.s32.totalorder %v12, %v17
    %vm20 = vcmp.eq.s32.totalorder %v13, %v18
    %v21 = vsel %vm19, 1.0, 0.0
    %v22 = vsel %vm20, 1.0, 0.0
    %v23 = vld [vmem:[%s1] sm:$0xff]
    %v24 = vld [vmem:[%s1 + $0x8] sm:$0xff]
    %v25 = vld [vmem:[%s1 + $0x10] sm:$0xff]
    %v26 = vld [vmem:[%s1 + $0x18] sm:$0xff]
    %v27 = vld [vmem:[%s1 + $0x20] sm:$0xff]
    %v28 = vld [vmem:[%s1 + $0x28] sm:$0xff]
    %v29 = vld [vmem:[%s1 + $0x30] sm:$0xff]
    %v30 = vld [vmem:[%s1 + $0x38] sm:$0xff]
    %v31 = vld [vmem:[%s1 + $0x40] sm:$0xff]
    %v32 = vld [vmem:[%s1 + $0x48] sm:$0xff]
    %v33 = vld [vmem:[%s1 + $0x50] sm:$0xff]
    %v34 = vld [vmem:[%s1 + $0x58] sm:$0xff]
    %v35 = vld [vmem:[%s1 + $0x60] sm:$0xff]
    %v36 = vld [vmem:[%s1 + $0x68] sm:$0xff]
    %v37 = vld [vmem:[%s1 + $0x70] sm:$0xff]
    %v38 = vld [vmem:[%s1 + $0x78] sm:$0xff]
    %v39 = vld [vmem:[%s1 + $0x80] sm:$0xff]
    %v40 = vld [vmem:[%s1 + $0x88] sm:$0xff]
    %v41 = vld [vmem:[%s1 + $0x90] sm:$0xff]
    %v42 = vld [vmem:[%s1 + $0x98] sm:$0xff]
    %v43 = vld [vmem:[%s1 + $0xa0] sm:$0xff]
    %v44 = vld [vmem:[%s1 + $0xa8] sm:$0xff]
    %v45 = vld [vmem:[%s1 + $0xb0] sm:$0xff]
    %v46 = vld [vmem:[%s1 + $0xb8] sm:$0xff]
    %v47 = vld [vmem:[%s1 + $0xc0] sm:$0xff]
    %v48 = vld [vmem:[%s1 + $0xc8] sm:$0xff]
    %v49 = vld [vmem:[%s1 + $0xd0] sm:$0xff]
    %v50 = vld [vmem:[%s1 + $0xd8] sm:$0xff]
    %v51 = vld [vmem:[%s1 + $0xe0] sm:$0xff]
    %v52 = vld [vmem:[%s1 + $0xe8] sm:$0xff]
    %v53 = vld [vmem:[%s1 + $0xf0] sm:$0xff]
    %v54 = vld [vmem:[%s1 + $0xf8] sm:$0xff]
    %55 = vmatprep.subr.mxu0 0.0
    %56 = vmatpush1.msra.mxu0 %v23
    %57 = vmatprep.subr.mxu0 0.0
    %58 = vmatpush1.msra.mxu0 %v24
    %59 = vmatprep.subr.mxu0 0.0
    %60 = vmatpush1.msra.mxu0 %v25
    %61 = vmatprep.subr.mxu0 0.0
    %62 = vmatpush1.msra.mxu0 %v26
    %63 = vmatprep.subr.mxu0 0.0
    %64 = vmatpush1.msra.mxu0 %v27
    %65 = vmatprep.subr.mxu0 0.0
    %66 = vmatpush1.msra.mxu0 %v28
    %67 = vmatprep.subr.mxu0 0.0
    %68 = vmatpush1.msra.mxu0 %v29
    %69 = vmatprep.subr.mxu0 0.0
    %70 = vmatpush1.msra.mxu0 %v30
    %71 = vmatprep.subr.mxu0 0.0
    %72 = vmatpush1.msra.mxu0 %v31
    %73 = vmatprep.subr.mxu0 0.0
    %74 = vmatpush1.msra.mxu0 %v32
    %75 = vmatprep.subr.mxu0 0.0
    %76 = vmatpush1.msra.mxu0 %v33
    %77 = vmatprep.subr.mxu0 0.0
    %78 = vmatpush1.msra.mxu0 %v34
    %79 = vmatprep.subr.mxu0 0.0
    %80 = vmatpush1.msra.mxu0 %v35
    %81 = vmatprep.subr.mxu0 0.0
    %82 = vmatpush1.msra.mxu0 %v36
    %83 = vmatprep.subr.mxu0 0.0
    %84 = vmatpush1.msra.mxu0 %v37
    %85 = vmatprep.subr.mxu0 0.0
    %86 = vmatpush1.msra.mxu0 %v38
    %87 = vmatprep.subr.mxu0 0.0
    %88 = vmatpush1.msra.mxu0 %v39
    %89 = vmatprep.subr.mxu0 0.0
    %90 = vmatpush1.msra.mxu0 %v40
    %91 = vmatprep.subr.mxu0 0.0
    %92 = vmatpush1.msra.mxu0 %v41
    %93 = vmatprep.subr.mxu0 0.0
    %94 = vmatpush1.msra.mxu0 %v42
    %95 = vmatprep.subr.mxu0 0.0
    %96 = vmatpush1.msra.mxu0 %v43
    %97 = vmatprep.subr.mxu0 0.0
    %98 = vmatpush1.msra.mxu0 %v44
    %99 = vmatprep.subr.mxu0 0.0
    %100 = vmatpush1.msra.mxu0 %v45
    %101 = vmatprep.subr.mxu0 0.0
    %102 = vmatpush1.msra.mxu0 %v46
    %103 = vmatprep.subr.mxu0 0.0
    %104 = vmatpush1.msra.mxu0 %v47
    %105 = vmatprep.subr.mxu0 0.0
    %106 = vmatpush1.msra.mxu0 %v48
    %107 = vmatprep.subr.mxu0 0.0
    %108 = vmatpush1.msra.mxu0 %v49
    %109 = vmatprep.subr.mxu0 0.0
    %110 = vmatpush1.msra.mxu0 %v50
    %111 = vmatprep.subr.mxu0 0.0
    %112 = vmatpush1.msra.mxu0 %v51
    %113 = vmatprep.subr.mxu0 0.0
    %114 = vmatpush1.msra.mxu0 %v52
    %115 = vmatprep.subr.mxu0 0.0
    %116 = vmatpush1.msra.mxu0 %v53
    %117 = vmatprep.subr.mxu0 0.0
    %118 = vmatpush1.msra.mxu0 %v54
    %119 = vmatprep.mubr.f32.mxu0 %v22
    %120 = vmatmul.mubr.f32.gmra.mrb[0].mxu0 %v21
    %v121 = vpop.f32.mrb[0].mxu0
    %v122 = vadd.f32 0.0, %v121
    %v123 = vpop.f32.mrb[0].mxu0
    %124 = vdwg.mxu0
    %v125 = vmax.f32 %v122, 1.0
    %v126 = vld [vmem:[%s1 + $0x100] sm:$0x1]
    %128 = vset.pattern.permute.xlu0 8
    %129 = vperm.xlu0 %128, %v125
    %v130 = vpop.permute.xlu0 %129
    %v132 = vrcp.pop %v130
    %v133 = vmul.f32 %v122, %v132
    %v134 = vlaneseq
    %v135 = vshrl.u32 %v134, 7
    %v136 = vsub.s32 0, %v135
    %v137 = vrot.slane %v126, %v136
    %v138 = vadd.f32 %v133, %v137
    %vm139 = vcmask 64512
    %140 = vst.msk [vmem:[#allocation2] sm:$0xff] %vm139, %v138
    // Predicated region
    $region10: #{tpu_custom_call.1} parent=1 // pred_check
      _
    $region11: #{tpu_custom_call.1} parent=1 // pred_check_branch
      %142 = sbr.rel (0) target = $region13
    $region12: #{tpu_custom_call.1} parent=1 // pred_region
      %s144 = ssub.s32 128, 128
      %145 = vsyncadd [#allocation3], %s144
      %s147 = sshll.u32 [#allocation2], 4
      %s148 = int_to_ptr.vmem [resolvable:$true] %s147
      %150 = dma.vmem_to_hbm [thread:$0]  %s148, 128, %s2, [#allocation3]
    $region13: #{tpu_custom_call.1} parent=1 // pred_fallthru
      _
    // Predicated region
    $region14: #{tpu_custom_call.1} parent=1 // pred_check
      _
    $region15: #{tpu_custom_call.1} parent=1 // pred_check_branch
      %152 = sbr.rel (0) target = $region17
    $region16: #{tpu_custom_call.1} parent=1 // pred_region
      %153 = dma.done [#allocation3], 128
    $region17: #{tpu_custom_call.1} parent=1 // pred_fallthru
      _
    %154 = vsyncpa [#allocation3], 1

</llo_original>
